<compile_context>
chip_gen: v7x
topology: tpu7x:2x2x1
jax: 0.10.0
libtpu: 0.0.40
codegen_flags: <defaults>
</compile_context>

<pallas_src>
import functools

import jax
import jax.numpy as jnp
from jax.experimental import pallas as pl
from jax.experimental.pallas import tpu as pltpu

NUM_LEVELS = 7
_MAX_TILE_ROWS = 2048    # preferred big tile (v7x); vmem_limit_bytes raised explicitly
_CHUNK_ROWS = 128        # in-kernel row chunk: each (128,128) f32 temp is only 16 vregs
_MIN_SPLIT_ROWS = 1024   # force >=2 balanced tiles (v7x megacore) above this


def _cdiv(a, b):
    return -(-a // b)


def _round_up(a, m):
    return _cdiv(a, m) * m


def _pick_tiling(rows, align):
    """Balanced row tiling -> (tile_rows, num_tiles, need_mask)."""
    num_tiles = _cdiv(rows, _MAX_TILE_ROWS)
    if rows >= _MIN_SPLIT_ROWS:
        num_tiles = max(num_tiles, 2)
        if num_tiles % 2:
            num_tiles += 1  # even tile count -> balanced split across v7x TensorCores
    tr = _cdiv(rows, num_tiles)
    tr_aligned = _round_up(tr, align)
    if tr_aligned <= rows:
        tr = tr_aligned      # aligned, balanced (possibly masked) tiles
    # else: tiny single tile; block equals the full array dim (always legal)
    num_tiles = _cdiv(rows, tr)
    need_mask = num_tiles * tr != rows
    return tr, num_tiles, need_mask


def _dss_bce_kernel(weight, rows_total, tile_rows, chunk, need_mask,
                    sublane_out, hard_labels, *refs):
    x_refs = refs[:NUM_LEVELS]
    y_ref = refs[NUM_LEVELS]
    out_ref = refs[NUM_LEVELS + 1]

    n_full = tile_rows // chunk
    rem = tile_rows - n_full * chunk
    tile_row0 = pl.program_id(0) * tile_rows

    def chunk_partial(r0, ch):
        # r0: row offset within this tile (traced or static); ch: static rows.
        y = y_ref[pl.ds(r0, ch), :].astype(jnp.float32)
        if hard_labels:
            y_is_one = y > 0.5
        else:
            om_y = 1.0 - y  # hoisted out of the per-level loop

        # Accumulates sum_i w_i * (y*log(x_i) + (1-y)*log(1-x_i)); the BCE
        # negation is folded into the single store at the end of the kernel.
        lvl = jnp.zeros((ch, 128), jnp.float32)
        for w, x_ref in zip(weight, x_refs):
            x = x_ref[pl.ds(r0, ch), :].astype(jnp.float32)
            if hard_labels:
                # y in {0,1}: only one log per element (half the EUP work).
                term = jnp.maximum(jnp.log(jnp.where(y_is_one, x, 1.0 - x)),
                                   jnp.float32(-100.0))
            else:
                # PyTorch binary_cross_entropy clamps the log terms at -100.
                log_x = jnp.maximum(jnp.log(x), jnp.float32(-100.0))
                log_1mx = jnp.maximum(jnp.log(1.0 - x), jnp.float32(-100.0))
                term = y * log_x + om_y * log_1mx
            if w == 1.0:
                lvl = lvl + term
            else:
                lvl = lvl + jnp.float32(w) * term

        if need_mask:
            # Single select on the per-chunk partial; drops any NaN/Inf that
            # log() produced on the OOB-padded garbage rows of the last tile.
            ridx = jax.lax.broadcasted_iota(jnp.int32, (ch, 128), 0)
            in_bounds = (tile_row0 + r0 + ridx) < rows_total
            lvl = jnp.where(in_bounds, lvl, jnp.float32(0.0))

        if sublane_out:
            # Fold sublane groups: (ch,128) -> (ch//8, 8, 128) -> (8,128).
            return jnp.sum(lvl.reshape(ch // 8, 8, 128), axis=0)
        return jnp.sum(lvl, axis=0, keepdims=True)  # tiny-rows fallback: (1,128)

    part_shape = (8, 128) if sublane_out else (1, 128)
    acc = jnp.zeros(part_shape, jnp.float32)

    if n_full > 0:
        def body(c, a):
            r0 = pl.multiple_of(c * chunk, chunk)
            return a + chunk_partial(r0, chunk)
        acc = jax.lax.fori_loop(0, n_full, body, acc, unroll=n_full <= 8)
    if rem > 0:
        acc = acc + chunk_partial(n_full * chunk, rem)

    out_ref[...] = (-acc)[None]  # negate once (bce = -(...)), lane-dense store


def dss_loss(x_list, label, weight=None, hard_labels=False):
    """x_list: list of NUM_LEVELS arrays, each the same shape as label (NCHW).

    hard_labels=True enables the one-log fast path; only valid when every
    label element is exactly 0 or 1 (typical DSS saliency masks).
    """
    if weight is None:
        weight = [1.0] * NUM_LEVELS
    assert len(x_list) == NUM_LEVELS and len(weight) == NUM_LEVELS

    total = label.size
    # TODO(synk): pad/handle N*C*H*W not divisible by 128 (not needed for
    # typical saliency-map shapes).
    assert total % 128 == 0, "require N*C*H*W to be a multiple of 128"
    rows = total // 128

    itemsizes = [jnp.dtype(x.dtype).itemsize for x in x_list]
    itemsizes.append(jnp.dtype(label.dtype).itemsize)
    align = 16 if min(itemsizes) < 4 else 8  # bf16 blocks pack 16 sublanes/vreg

    tr, num_tiles, need_mask = _pick_tiling(rows, align)
    sublane_out = (tr % 8) == 0
    part_rows = 8 if sublane_out else 1

    # Lane-dense (rows, 128) views; contiguous reshape, no extra HBM traffic.
    xs = [x.reshape(rows, 128) for x in x_list]
    y = label.reshape(rows, 128)
    weight = tuple(float(w) for w in weight)  # static, folded into the kernel

    kernel = functools.partial(
        _dss_bce_kernel, weight, rows, tr, _CHUNK_ROWS,
        need_mask, sublane_out, bool(hard_labels))

    in_spec = pl.BlockSpec((tr, 128), lambda i: (i, 0))
    out_shape = jax.ShapeDtypeStruct((num_tiles, part_rows, 128), jnp.float32)
    out_spec = pl.BlockSpec((1, part_rows, 128), lambda i: (i, 0, 0))

    # Double-buffered input blocks + headroom; keeps big tiles legal on every
    # generation (actual need tops out ~16-24 MiB, well under v7x's 64 MiB).
    step_in_bytes = sum(tr * 128 * s for s in itemsizes)
    vmem_bytes = int(min(max(2 * step_in_bytes + (8 << 20), 16 << 20), 32 << 20))

    partials = pl.pallas_call(
        kernel,
        out_shape=out_shape,
        grid=(num_tiles,),
        in_specs=[in_spec] * (NUM_LEVELS + 1),
        out_specs=out_spec,
        compiler_params=pltpu.CompilerParams(
            dimension_semantics=("parallel",),
            vmem_limit_bytes=vmem_bytes),
    )(*xs, y)

    # Final cross-lane/tile reduction + normalization (once, outside the grid).
    return jnp.sum(partials) / jnp.float32(total)


def _reference(x_list, label, weight):
    total = label.size
    y = label.astype(jnp.float32)
    loss = 0.0
    for w, x in zip(weight, x_list):
        x = x.astype(jnp.float32)
        log_x = jnp.maximum(jnp.log(x), -100.0)
        log_1mx = jnp.maximum(jnp.log(1.0 - x), -100.0)
        bce = -(y * log_x + (1.0 - y) * log_1mx)
        loss = loss + w * jnp.sum(bce) / total
    return loss


if __name__ == "__main__":
    weight = [1.0] * NUM_LEVELS

    def run_case(key, shape, pred_dtype=jnp.float32, hard_labels=False):
        keys = jax.random.split(key, NUM_LEVELS + 1)
        x_list = [jax.nn.sigmoid(
                      jax.random.normal(keys[i], shape, jnp.float32)
                  ).astype(pred_dtype) for i in range(NUM_LEVELS)]
        label = jax.random.bernoulli(keys[-1], 0.5, shape).astype(jnp.float32)
        loss = dss_loss(x_list, label, weight, hard_labels=hard_labels)
        jax.block_until_ready(loss)
        ref = _reference(x_list, label, weight)
        assert jnp.allclose(loss, ref, rtol=1e-4, atol=1e-5), (
            shape, pred_dtype, hard_labels, loss, ref)

    # 1) Small f32 maps (single tile, remainder-chunk-only path).
    run_case(jax.random.PRNGKey(0), (2, 4, 16, 16))
    # 2) bf16 predictions (DMA in bf16, cast to f32 inside the kernel).
    run_case(jax.random.PRNGKey(0), (2, 4, 16, 16), pred_dtype=jnp.bfloat16)
    # 3) Multi-tile balanced grid (rows=1040 -> 2 x 520 tiles, no mask).
    run_case(jax.random.PRNGKey(1), (2, 1, 260, 256))
    # 4) Multi-tile with a masked partial last tile (rows=1048 -> 2 x 528).
    run_case(jax.random.PRNGKey(2), (1, 1, 1048, 128))
    # 5) Binary-label one-log fast path on the masked multi-tile case.
    run_case(jax.random.PRNGKey(2), (1, 1, 1048, 128), hard_labels=True)

    print("KERNEL_OK")
</pallas_src>

<mosaic_0001>
module attributes {stable_mosaic.version = 11 : i64} {
  func.func @_dss_bce_kernel(%arg0: i32, %arg1: memref<16x128xf32, #tpu.memory_space<vmem>>, %arg2: memref<16x128xf32, #tpu.memory_space<vmem>>, %arg3: memref<16x128xf32, #tpu.memory_space<vmem>>, %arg4: memref<16x128xf32, #tpu.memory_space<vmem>>, %arg5: memref<16x128xf32, #tpu.memory_space<vmem>>, %arg6: memref<16x128xf32, #tpu.memory_space<vmem>>, %arg7: memref<16x128xf32, #tpu.memory_space<vmem>>, %arg8: memref<16x128xf32, #tpu.memory_space<vmem>>, %arg9: memref<1x8x128xf32, #tpu.memory_space<vmem>>) attributes {dimension_semantics = [#tpu.dimension_semantics<parallel>], iteration_bounds = array<i64: 1>, scalar_prefetch = 0 : i64, scratch_operands = 0 : i64, tpu.core_type = #tpu.core_type<tc>, window_params = [{transform_indices = @transform_0, window_bounds = array<i64: 16, 128>}, {transform_indices = @transform_1, window_bounds = array<i64: 16, 128>}, {transform_indices = @transform_2, window_bounds = array<i64: 16, 128>}, {transform_indices = @transform_3, window_bounds = array<i64: 16, 128>}, {transform_indices = @transform_4, window_bounds = array<i64: 16, 128>}, {transform_indices = @transform_5, window_bounds = array<i64: 16, 128>}, {transform_indices = @transform_6, window_bounds = array<i64: 16, 128>}, {transform_indices = @transform_7, window_bounds = array<i64: 16, 128>}, {transform_indices = @transform_8, window_bounds = array<i64: 1, 8, 128>}]} {
    %cst = arith.constant 0.000000e+00 : f32
    %0 = vector.broadcast %cst : f32 to vector<8x128xf32>
    %c0 = arith.constant 0 : index
    %c0_0 = arith.constant 0 : index
    %1 = vector.load %arg8[%c0, %c0_0] : memref<16x128xf32, #tpu.memory_space<vmem>>, vector<16x128xf32>
    %cst_1 = arith.constant 1.000000e+00 : f32
    %2 = vector.broadcast %cst_1 : f32 to vector<16x128xf32>
    %3 = arith.subf %2, %1 : vector<16x128xf32>
    %cst_2 = arith.constant 0.000000e+00 : f32
    %4 = vector.broadcast %cst_2 : f32 to vector<16x128xf32>
    %c0_3 = arith.constant 0 : index
    %c0_4 = arith.constant 0 : index
    %5 = vector.load %arg1[%c0_3, %c0_4] : memref<16x128xf32, #tpu.memory_space<vmem>>, vector<16x128xf32>
    %6 = math.log %5 : vector<16x128xf32>
    %cst_5 = arith.constant -1.000000e+02 : f32
    %7 = vector.broadcast %cst_5 : f32 to vector<16x128xf32>
    %8 = arith.maximumf %6, %7 : vector<16x128xf32>
    %cst_6 = arith.constant 1.000000e+00 : f32
    %9 = vector.broadcast %cst_6 : f32 to vector<16x128xf32>
    %10 = arith.subf %9, %5 : vector<16x128xf32>
    %11 = math.log %10 : vector<16x128xf32>
    %cst_7 = arith.constant -1.000000e+02 : f32
    %12 = vector.broadcast %cst_7 : f32 to vector<16x128xf32>
    %13 = arith.maximumf %11, %12 : vector<16x128xf32>
    %14 = arith.mulf %1, %8 : vector<16x128xf32>
    %15 = arith.mulf %3, %13 : vector<16x128xf32>
    %16 = arith.addf %14, %15 : vector<16x128xf32>
    %17 = arith.addf %4, %16 : vector<16x128xf32>
    %c0_8 = arith.constant 0 : index
    %c0_9 = arith.constant 0 : index
    %18 = vector.load %arg2[%c0_8, %c0_9] : memref<16x128xf32, #tpu.memory_space<vmem>>, vector<16x128xf32>
    %19 = math.log %18 : vector<16x128xf32>
    %cst_10 = arith.constant -1.000000e+02 : f32
    %20 = vector.broadcast %cst_10 : f32 to vector<16x128xf32>
    %21 = arith.maximumf %19, %20 : vector<16x128xf32>
    %cst_11 = arith.constant 1.000000e+00 : f32
    %22 = vector.broadcast %cst_11 : f32 to vector<16x128xf32>
    %23 = arith.subf %22, %18 : vector<16x128xf32>
    %24 = math.log %23 : vector<16x128xf32>
    %cst_12 = arith.constant -1.000000e+02 : f32
    %25 = vector.broadcast %cst_12 : f32 to vector<16x128xf32>
    %26 = arith.maximumf %24, %25 : vector<16x128xf32>
    %27 = arith.mulf %1, %21 : vector<16x128xf32>
    %28 = arith.mulf %3, %26 : vector<16x128xf32>
    %29 = arith.addf %27, %28 : vector<16x128xf32>
    %30 = arith.addf %17, %29 : vector<16x128xf32>
    %c0_13 = arith.constant 0 : index
    %c0_14 = arith.constant 0 : index
    %31 = vector.load %arg3[%c0_13, %c0_14] : memref<16x128xf32, #tpu.memory_space<vmem>>, vector<16x128xf32>
    %32 = math.log %31 : vector<16x128xf32>
    %cst_15 = arith.constant -1.000000e+02 : f32
    %33 = vector.broadcast %cst_15 : f32 to vector<16x128xf32>
    %34 = arith.maximumf %32, %33 : vector<16x128xf32>
    %cst_16 = arith.constant 1.000000e+00 : f32
    %35 = vector.broadcast %cst_16 : f32 to vector<16x128xf32>
    %36 = arith.subf %35, %31 : vector<16x128xf32>
    %37 = math.log %36 : vector<16x128xf32>
    %cst_17 = arith.constant -1.000000e+02 : f32
    %38 = vector.broadcast %cst_17 : f32 to vector<16x128xf32>
    %39 = arith.maximumf %37, %38 : vector<16x128xf32>
    %40 = arith.mulf %1, %34 : vector<16x128xf32>
    %41 = arith.mulf %3, %39 : vector<16x128xf32>
    %42 = arith.addf %40, %41 : vector<16x128xf32>
    %43 = arith.addf %30, %42 : vector<16x128xf32>
    %c0_18 = arith.constant 0 : index
    %c0_19 = arith.constant 0 : index
    %44 = vector.load %arg4[%c0_18, %c0_19] : memref<16x128xf32, #tpu.memory_space<vmem>>, vector<16x128xf32>
    %45 = math.log %44 : vector<16x128xf32>
    %cst_20 = arith.constant -1.000000e+02 : f32
    %46 = vector.broadcast %cst_20 : f32 to vector<16x128xf32>
    %47 = arith.maximumf %45, %46 : vector<16x128xf32>
    %cst_21 = arith.constant 1.000000e+00 : f32
    %48 = vector.broadcast %cst_21 : f32 to vector<16x128xf32>
    %49 = arith.subf %48, %44 : vector<16x128xf32>
    %50 = math.log %49 : vector<16x128xf32>
    %cst_22 = arith.constant -1.000000e+02 : f32
    %51 = vector.broadcast %cst_22 : f32 to vector<16x128xf32>
    %52 = arith.maximumf %50, %51 : vector<16x128xf32>
    %53 = arith.mulf %1, %47 : vector<16x128xf32>
    %54 = arith.mulf %3, %52 : vector<16x128xf32>
    %55 = arith.addf %53, %54 : vector<16x128xf32>
    %56 = arith.addf %43, %55 : vector<16x128xf32>
    %c0_23 = arith.constant 0 : index
    %c0_24 = arith.constant 0 : index
    %57 = vector.load %arg5[%c0_23, %c0_24] : memref<16x128xf32, #tpu.memory_space<vmem>>, vector<16x128xf32>
    %58 = math.log %57 : vector<16x128xf32>
    %cst_25 = arith.constant -1.000000e+02 : f32
    %59 = vector.broadcast %cst_25 : f32 to vector<16x128xf32>
    %60 = arith.maximumf %58, %59 : vector<16x128xf32>
    %cst_26 = arith.constant 1.000000e+00 : f32
    %61 = vector.broadcast %cst_26 : f32 to vector<16x128xf32>
    %62 = arith.subf %61, %57 : vector<16x128xf32>
    %63 = math.log %62 : vector<16x128xf32>
    %cst_27 = arith.constant -1.000000e+02 : f32
    %64 = vector.broadcast %cst_27 : f32 to vector<16x128xf32>
    %65 = arith.maximumf %63, %64 : vector<16x128xf32>
    %66 = arith.mulf %1, %60 : vector<16x128xf32>
    %67 = arith.mulf %3, %65 : vector<16x128xf32>
    %68 = arith.addf %66, %67 : vector<16x128xf32>
    %69 = arith.addf %56, %68 : vector<16x128xf32>
    %c0_28 = arith.constant 0 : index
    %c0_29 = arith.constant 0 : index
    %70 = vector.load %arg6[%c0_28, %c0_29] : memref<16x128xf32, #tpu.memory_space<vmem>>, vector<16x128xf32>
    %71 = math.log %70 : vector<16x128xf32>
    %cst_30 = arith.constant -1.000000e+02 : f32
    %72 = vector.broadcast %cst_30 : f32 to vector<16x128xf32>
    %73 = arith.maximumf %71, %72 : vector<16x128xf32>
    %cst_31 = arith.constant 1.000000e+00 : f32
    %74 = vector.broadcast %cst_31 : f32 to vector<16x128xf32>
    %75 = arith.subf %74, %70 : vector<16x128xf32>
    %76 = math.log %75 : vector<16x128xf32>
    %cst_32 = arith.constant -1.000000e+02 : f32
    %77 = vector.broadcast %cst_32 : f32 to vector<16x128xf32>
    %78 = arith.maximumf %76, %77 : vector<16x128xf32>
    %79 = arith.mulf %1, %73 : vector<16x128xf32>
    %80 = arith.mulf %3, %78 : vector<16x128xf32>
    %81 = arith.addf %79, %80 : vector<16x128xf32>
    %82 = arith.addf %69, %81 : vector<16x128xf32>
    %c0_33 = arith.constant 0 : index
    %c0_34 = arith.constant 0 : index
    %83 = vector.load %arg7[%c0_33, %c0_34] : memref<16x128xf32, #tpu.memory_space<vmem>>, vector<16x128xf32>
    %84 = math.log %83 : vector<16x128xf32>
    %cst_35 = arith.constant -1.000000e+02 : f32
    %85 = vector.broadcast %cst_35 : f32 to vector<16x128xf32>
    %86 = arith.maximumf %84, %85 : vector<16x128xf32>
    %cst_36 = arith.constant 1.000000e+00 : f32
    %87 = vector.broadcast %cst_36 : f32 to vector<16x128xf32>
    %88 = arith.subf %87, %83 : vector<16x128xf32>
    %89 = math.log %88 : vector<16x128xf32>
    %cst_37 = arith.constant -1.000000e+02 : f32
    %90 = vector.broadcast %cst_37 : f32 to vector<16x128xf32>
    %91 = arith.maximumf %89, %90 : vector<16x128xf32>
    %92 = arith.mulf %1, %86 : vector<16x128xf32>
    %93 = arith.mulf %3, %91 : vector<16x128xf32>
    %94 = arith.addf %92, %93 : vector<16x128xf32>
    %95 = arith.addf %82, %94 : vector<16x128xf32>
    %96 = vector.shape_cast %95 : vector<16x128xf32> to vector<2x8x128xf32>
    %cst_38 = arith.constant dense<0.000000e+00> : vector<8x128xf32>
    %97 = vector.multi_reduction <add>, %96, %cst_38 [0] : vector<2x8x128xf32> to vector<8x128xf32>
    %98 = arith.addf %0, %97 : vector<8x128xf32>
    %cst_39 = arith.constant 0.000000e+00 : f32
    %99 = vector.broadcast %cst_39 : f32 to vector<8x128xf32>
    %100 = arith.subf %99, %98 : vector<8x128xf32>
    %101 = vector.shape_cast %100 : vector<8x128xf32> to vector<1x8x128xf32>
    %c0_40 = arith.constant 0 : index
    %c0_41 = arith.constant 0 : index
    %c0_42 = arith.constant 0 : index
    %102 = vector.load %arg9[%c0_40, %c0_41, %c0_42] : memref<1x8x128xf32, #tpu.memory_space<vmem>>, vector<1x8x128xf32>
    tpu.vector_store %arg9[%c0_40, %c0_41, %c0_42], %101 {strides = array<i32>} : memref<1x8x128xf32, #tpu.memory_space<vmem>>, vector<1x8x128xf32>,
    return
  }
  func.func @transform_0(%arg0: i32) -> (i32, i32) {
    %c0_i32 = arith.constant 0 : i32
    %c0_i32_0 = arith.constant 0 : i32
    return %arg0, %c0_i32 : i32, i32
  }
  func.func @transform_1(%arg0: i32) -> (i32, i32) {
    %c0_i32 = arith.constant 0 : i32
    %c0_i32_0 = arith.constant 0 : i32
    return %arg0, %c0_i32 : i32, i32
  }
  func.func @transform_2(%arg0: i32) -> (i32, i32) {
    %c0_i32 = arith.constant 0 : i32
    %c0_i32_0 = arith.constant 0 : i32
    return %arg0, %c0_i32 : i32, i32
  }
  func.func @transform_3(%arg0: i32) -> (i32, i32) {
    %c0_i32 = arith.constant 0 : i32
    %c0_i32_0 = arith.constant 0 : i32
    return %arg0, %c0_i32 : i32, i32
  }
  func.func @transform_4(%arg0: i32) -> (i32, i32) {
    %c0_i32 = arith.constant 0 : i32
    %c0_i32_0 = arith.constant 0 : i32
    return %arg0, %c0_i32 : i32, i32
  }
  func.func @transform_5(%arg0: i32) -> (i32, i32) {
    %c0_i32 = arith.constant 0 : i32
    %c0_i32_0 = arith.constant 0 : i32
    return %arg0, %c0_i32 : i32, i32
  }
  func.func @transform_6(%arg0: i32) -> (i32, i32) {
    %c0_i32 = arith.constant 0 : i32
    %c0_i32_0 = arith.constant 0 : i32
    return %arg0, %c0_i32 : i32, i32
  }
  func.func @transform_7(%arg0: i32) -> (i32, i32) {
    %c0_i32 = arith.constant 0 : i32
    %c0_i32_0 = arith.constant 0 : i32
    return %arg0, %c0_i32 : i32, i32
  }
  func.func @transform_8(%arg0: i32) -> (i32, i32, i32) {
    %c0_i32 = arith.constant 0 : i32
    %c0_i32_0 = arith.constant 0 : i32
    %c0_i32_1 = arith.constant 0 : i32
    return %arg0, %c0_i32, %c0_i32_0 : i32, i32, i32
  }
}

</mosaic_0001>

<llo_original>
// kernel: tpu_custom_call.1
$region0: #{tpu_custom_call.1}
  #allocation0 [shape = 'u32[]', space=smem, size = 0x4, offset = 0x4, fixed_abs, tag = 'smem constant byte address 0x4 - core index']
  #allocation1 [shape = 'u32[144,128]{1,0:T(1,128)}', space=vmem, size = 0x12000, scoped, tag = 'internal scratch']
  %s0 = inlined_call_operand.hbm [shape: f32[16,128], index: 0, kind: input, shape index: {}]
  %s1 = inlined_call_operand.hbm [shape: f32[16,128], index: 1, kind: input, shape index: {}]
  %s2 = inlined_call_operand.hbm [shape: f32[16,128], index: 2, kind: input, shape index: {}]
  %s3 = inlined_call_operand.hbm [shape: f32[16,128], index: 3, kind: input, shape index: {}]
  %s4 = inlined_call_operand.hbm [shape: f32[16,128], index: 4, kind: input, shape index: {}]
  %s5 = inlined_call_operand.vmem [shape: f32[16,128], index: 5, kind: input, shape index: {}]
  %s6 = inlined_call_operand.hbm [shape: f32[16,128], index: 6, kind: input, shape index: {}]
  %s7 = inlined_call_operand.hbm [shape: f32[16,128], index: 7, kind: input, shape index: {}]
  %s8 = inlined_call_operand.hbm [shape: f32[1,8,128], index: 8, kind: output, shape index: {}]
  %s9 = sld [smem:[#allocation0]]
  $region70: #{tpu_custom_call.1} parent=0
    _
  %s11 = ssub.s32 1, %s9
  %s12 = scalar_select 0, %s11, %s9
  $region1: #{tpu_custom_call.1} parent=0
    #allocation2 [shape = 'u8[8192]{0}', space=vmem, size = 0x2000, scoped, tag = 'input window, operand 0, single buffered']
    #allocation3 [shape = 's32[1]{0}', space=sflag, size = 0x4, scoped, tag = 'scoped memory for tpu_custom_call.1']
    #allocation4 [shape = 's32[1]{0}', space=sflag, size = 0x4, scoped, tag = 'scoped memory for tpu_custom_call.1']
    #allocation5 [shape = 'u8[8192]{0}', space=vmem, size = 0x2000, scoped, tag = 'input window, operand 1, single buffered']
    #allocation6 [shape = 's32[1]{0}', space=sflag, size = 0x4, scoped, tag = 'scoped memory for tpu_custom_call.1']
    #allocation7 [shape = 'u8[8192]{0}', space=vmem, size = 0x2000, scoped, tag = 'input window, operand 2, single buffered']
    #allocation8 [shape = 'u8[8192]{0}', space=vmem, size = 0x2000, scoped, tag = 'input window, operand 3, single buffered']
    #allocation9 [shape = 's32[1]{0}', space=sflag, size = 0x4, scoped, tag = 'scoped memory for tpu_custom_call.1']
    #allocation10 [shape = 'u8[8192]{0}', space=vmem, size = 0x2000, scoped, tag = 'input window, operand 4, single buffered']
    #allocation11 [shape = 'u8[8192]{0}', space=vmem, size = 0x2000, scoped, tag = 'input window, operand 6, single buffered']
    #allocation12 [shape = 's32[1]{0}', space=sflag, size = 0x4, scoped, tag = 'scoped memory for tpu_custom_call.1']
    #allocation13 [shape = 'u8[8192]{0}', space=vmem, size = 0x2000, scoped, tag = 'input window, operand 7, single buffered']
    #allocation14 [shape = 'u8[4096]{0}', space=vmem, size = 0x1000, scoped, tag = 'output window, operand 0, single buffered']
    %13 = vsyncpa [#allocation3], 0
    %14 = vsyncpa [#allocation6], 0
    %15 = vsyncpa [#allocation9], 0
    %16 = vsyncpa [#allocation12], 0
    %17 = vsyncpa [#allocation4], 0
    // Predicated region
    $region2: #{tpu_custom_call.1} parent=1 // pred_check
      _
    $region3: #{tpu_custom_call.1} parent=1 // pred_check_branch
      %19 = sbr.rel (0) target = $region5
    $region4: #{tpu_custom_call.1} parent=1 // pred_region
      %s21 = ssub.s32 256, 256
      %22 = vsyncadd [#allocation3], %s21
      %s23 = sshll.u32 [#allocation2], 4
      %s24 = int_to_ptr.vmem [resolvable:$true] %s23
      %29 = dma.hbm_to_vmem [thread:$0]  %s0, 256, %s24, [#allocation3], 128, 128, 8
    $region5: #{tpu_custom_call.1} parent=1 // pred_fallthru
      _
    // Predicated region
    $region6: #{tpu_custom_call.1} parent=1 // pred_check
      _
    $region7: #{tpu_custom_call.1} parent=1 // pred_check_branch
      %31 = sbr.rel (0) target = $region9
    $region8: #{tpu_custom_call.1} parent=1 // pred_region
      %s33 = ssub.s32 256, 256
      %34 = vsyncadd [#allocation6], %s33
      %s35 = sshll.u32 [#allocation5], 4
      %s36 = int_to_ptr.vmem [resolvable:$true] %s35
      %41 = dma.hbm_to_vmem [thread:$0]  %s1, 256, %s36, [#allocation6], 128, 128, 8
    $region9: #{tpu_custom_call.1} parent=1 // pred_fallthru
      _
    // Predicated region
    $region10: #{tpu_custom_call.1} parent=1 // pred_check
      _
    $region11: #{tpu_custom_call.1} parent=1 // pred_check_branch
      %43 = sbr.rel (0) target = $region13
    $region12: #{tpu_custom_call.1} parent=1 // pred_region
      %s45 = ssub.s32 256, 256
      %46 = vsyncadd [#allocation6], %s45
      %s47 = sshll.u32 [#allocation7], 4
      %s48 = int_to_ptr.vmem [resolvable:$true] %s47
      %53 = dma.hbm_to_vmem [thread:$0]  %s2, 256, %s48, [#allocation6], 128, 128, 8
    $region13: #{tpu_custom_call.1} parent=1 // pred_fallthru
      _
    // Predicated region
    $region14: #{tpu_custom_call.1} parent=1 // pred_check
      _
    $region15: #{tpu_custom_call.1} parent=1 // pred_check_branch
      %55 = sbr.rel (0) target = $region17
    $region16: #{tpu_custom_call.1} parent=1 // pred_region
      %s57 = ssub.s32 256, 256
      %58 = vsyncadd [#allocation9], %s57
      %s59 = sshll.u32 [#allocation8], 4
      %s60 = int_to_ptr.vmem [resolvable:$true] %s59
      %65 = dma.hbm_to_vmem [thread:$0]  %s3, 256, %s60, [#allocation9], 128, 128, 8
    $region17: #{tpu_custom_call.1} parent=1 // pred_fallthru
      _
    // Predicated region
    $region18: #{tpu_custom_call.1} parent=1 // pred_check
      _
    $region19: #{tpu_custom_call.1} parent=1 // pred_check_branch
      %67 = sbr.rel (0) target = $region21
    $region20: #{tpu_custom_call.1} parent=1 // pred_region
      %s69 = ssub.s32 256, 256
      %70 = vsyncadd [#allocation9], %s69
      %s71 = sshll.u32 [#allocation10], 4
      %s72 = int_to_ptr.vmem [resolvable:$true] %s71
      %77 = dma.hbm_to_vmem [thread:$0]  %s4, 256, %s72, [#allocation9], 128, 128, 8
    $region21: #{tpu_custom_call.1} parent=1 // pred_fallthru
      _
    // Predicated region
    $region22: #{tpu_custom_call.1} parent=1 // pred_check
      _
    $region23: #{tpu_custom_call.1} parent=1 // pred_check_branch
      %79 = sbr.rel (0) target = $region25
    $region24: #{tpu_custom_call.1} parent=1 // pred_region
      _
    $region25: #{tpu_custom_call.1} parent=1 // pred_fallthru
      _
    // Predicated region
    $region26: #{tpu_custom_call.1} parent=1 // pred_check
      _
    $region27: #{tpu_custom_call.1} parent=1 // pred_check_branch
      %81 = sbr.rel (0) target = $region29
    $region28: #{tpu_custom_call.1} parent=1 // pred_region
      %s83 = ssub.s32 256, 256
      %84 = vsyncadd [#allocation12], %s83
      %s85 = sshll.u32 [#allocation11], 4
      %s86 = int_to_ptr.vmem [resolvable:$true] %s85
      %91 = dma.hbm_to_vmem [thread:$0]  %s6, 256, %s86, [#allocation12], 128, 128, 8
    $region29: #{tpu_custom_call.1} parent=1 // pred_fallthru
      _
    // Predicated region
    $region30: #{tpu_custom_call.1} parent=1 // pred_check
      _
    $region31: #{tpu_custom_call.1} parent=1 // pred_check_branch
      %93 = sbr.rel (0) target = $region33
    $region32: #{tpu_custom_call.1} parent=1 // pred_region
      %s95 = ssub.s32 256, 256
      %96 = vsyncadd [#allocation12], %s95
      %s97 = sshll.u32 [#allocation13], 4
      %s98 = int_to_ptr.vmem [resolvable:$true] %s97
      %103 = dma.hbm_to_vmem [thread:$0]  %s7, 256, %s98, [#allocation12], 128, 128, 8
    $region33: #{tpu_custom_call.1} parent=1 // pred_fallthru
      _
    // Predicated region
    $region34: #{tpu_custom_call.1} parent=1 // pred_check
      _
    $region35: #{tpu_custom_call.1} parent=1 // pred_check_branch
      %105 = sbr.rel (0) target = $region37
    $region36: #{tpu_custom_call.1} parent=1 // pred_region
      %106 = dma.done [#allocation3], 256
    $region37: #{tpu_custom_call.1} parent=1 // pred_fallthru
      _
    // Predicated region
    $region38: #{tpu_custom_call.1} parent=1 // pred_check
      _
    $region39: #{tpu_custom_call.1} parent=1 // pred_check_branch
      %108 = sbr.rel (0) target = $region41
    $region40: #{tpu_custom_call.1} parent=1 // pred_region
      %109 = dma.done [#allocation6], 256
    $region41: #{tpu_custom_call.1} parent=1 // pred_fallthru
      _
    // Predicated region
    $region42: #{tpu_custom_call.1} parent=1 // pred_check
      _
    $region43: #{tpu_custom_call.1} parent=1 // pred_check_branch
      %111 = sbr.rel (0) target = $region45
    $region44: #{tpu_custom_call.1} parent=1 // pred_region
      %112 = dma.done [#allocation6], 256
    $region45: #{tpu_custom_call.1} parent=1 // pred_fallthru
      _
    // Predicated region
    $region46: #{tpu_custom_call.1} parent=1 // pred_check
      _
    $region47: #{tpu_custom_call.1} parent=1 // pred_check_branch
      %114 = sbr.rel (0) target = $region49
    $region48: #{tpu_custom_call.1} parent=1 // pred_region
      %115 = dma.done [#allocation9], 256
    $region49: #{tpu_custom_call.1} parent=1 // pred_fallthru
      _
    // Predicated region
    $region50: #{tpu_custom_call.1} parent=1 // pred_check
      _
    $region51: #{tpu_custom_call.1} parent=1 // pred_check_branch
      %117 = sbr.rel (0) target = $region53
    $region52: #{tpu_custom_call.1} parent=1 // pred_region
      %118 = dma.done [#allocation9], 256
    $region53: #{tpu_custom_call.1} parent=1 // pred_fallthru
      _
    // Predicated region
    $region54: #{tpu_custom_call.1} parent=1 // pred_check
      _
    $region55: #{tpu_custom_call.1} parent=1 // pred_check_branch
      %120 = sbr.rel (0) target = $region57
    $region56: #{tpu_custom_call.1} parent=1 // pred_region
      %121 = dma.done [#allocation12], 256
    $region57: #{tpu_custom_call.1} parent=1 // pred_fallthru
      _
    // Predicated region
    $region58: #{tpu_custom_call.1} parent=1 // pred_check
      _
    $region59: #{tpu_custom_call.1} parent=1 // pred_check_branch
      %123 = sbr.rel (0) target = $region61
    $region60: #{tpu_custom_call.1} parent=1 // pred_region
      %124 = dma.done [#allocation12], 256
    $region61: #{tpu_custom_call.1} parent=1 // pred_fallthru
      _
    %v125 = vld [vmem:[#allocation13] sm:$0xff]
    %v126 = vld [vmem:[#allocation13 + $0x8] sm:$0xff]
    %v127 = vsub.f32 1.0, %v125
    %v128 = vsub.f32 1.0, %v126
    %v129 = vld [vmem:[#allocation2] sm:$0xff]
    %v130 = vld [vmem:[#allocation2 + $0x8] sm:$0xff]
    %v131 = vlog2.pop %v129
    %v132 = vmul.f32 %v131, 0.6931472
    %v133 = vlog2.pop %v130
    %v134 = vmul.f32 %v133, 0.6931472
    %v135 = vmax.f32 %v132, -100.0
    %v136 = vmax.f32 %v134, -100.0
    %v137 = vsub.f32 1.0, %v129
    %v138 = vsub.f32 1.0, %v130
    %v139 = vlog2.pop %v137
    %v140 = vmul.f32 %v139, 0.6931472
    %v141 = vlog2.pop %v138
    %v142 = vmul.f32 %v141, 0.6931472
    %v143 = vmax.f32 %v140, -100.0
    %v144 = vmax.f32 %v142, -100.0
    %v145 = vmul.f32 %v125, %v135
    %v146 = vmul.f32 %v126, %v136
    %v147 = vmul.f32 %v127, %v143
    %v148 = vmul.f32 %v128, %v144
    %v149 = vadd.f32 %v145, %v147
    %v150 = vadd.f32 %v146, %v148
    %v151 = vadd.f32 %v149, 0.0
    %v152 = vadd.f32 %v150, 0.0
    %v153 = vld [vmem:[#allocation5] sm:$0xff]
    %v154 = vld [vmem:[#allocation5 + $0x8] sm:$0xff]
    %v155 = vlog2.pop %v153
    %v156 = vmul.f32 %v155, 0.6931472
    %v157 = vlog2.pop %v154
    %v158 = vmul.f32 %v157, 0.6931472
    %v159 = vmax.f32 %v156, -100.0
    %v160 = vmax.f32 %v158, -100.0
    %v161 = vsub.f32 1.0, %v153
    %v162 = vsub.f32 1.0, %v154
    %v163 = vlog2.pop %v161
    %v164 = vmul.f32 %v163, 0.6931472
    %v165 = vlog2.pop %v162
    %v166 = vmul.f32 %v165, 0.6931472
    %v167 = vmax.f32 %v164, -100.0
    %v168 = vmax.f32 %v166, -100.0
    %v169 = vmul.f32 %v125, %v159
    %v170 = vmul.f32 %v126, %v160
    %v171 = vmul.f32 %v127, %v167
    %v172 = vmul.f32 %v128, %v168
    %v173 = vadd.f32 %v169, %v171
    %v174 = vadd.f32 %v170, %v172
    %v175 = vadd.f32 %v151, %v173
    %v176 = vadd.f32 %v152, %v174
    %v177 = vld [vmem:[#allocation7] sm:$0xff]
    %v178 = vld [vmem:[#allocation7 + $0x8] sm:$0xff]
    %v179 = vlog2.pop %v177
    %v180 = vmul.f32 %v179, 0.6931472
    %v181 = vlog2.pop %v178
    %v182 = vmul.f32 %v181, 0.6931472
    %v183 = vmax.f32 %v180, -100.0
    %v184 = vmax.f32 %v182, -100.0
    %v185 = vsub.f32 1.0, %v177
    %v186 = vsub.f32 1.0, %v178
    %v187 = vlog2.pop %v185
    %v188 = vmul.f32 %v187, 0.6931472
    %v189 = vlog2.pop %v186
    %v190 = vmul.f32 %v189, 0.6931472
    %v191 = vmax.f32 %v188, -100.0
    %v192 = vmax.f32 %v190, -100.0
    %v193 = vmul.f32 %v125, %v183
    %v194 = vmul.f32 %v126, %v184
    %v195 = vmul.f32 %v127, %v191
    %v196 = vmul.f32 %v128, %v192
    %v197 = vadd.f32 %v193, %v195
    %v198 = vadd.f32 %v194, %v196
    %v199 = vadd.f32 %v175, %v197
    %v200 = vadd.f32 %v176, %v198
    %v201 = vld [vmem:[#allocation8] sm:$0xff]
    %v202 = vld [vmem:[#allocation8 + $0x8] sm:$0xff]
    %v203 = vlog2.pop %v201
    %v204 = vmul.f32 %v203, 0.6931472
    %v205 = vlog2.pop %v202
    %v206 = vmul.f32 %v205, 0.6931472
    %v207 = vmax.f32 %v204, -100.0
    %v208 = vmax.f32 %v206, -100.0
    %v209 = vsub.f32 1.0, %v201
    %v210 = vsub.f32 1.0, %v202
    %v211 = vlog2.pop %v209
    %v212 = vmul.f32 %v211, 0.6931472
    %v213 = vlog2.pop %v210
    %v214 = vmul.f32 %v213, 0.6931472
    %v215 = vmax.f32 %v212, -100.0
    %v216 = vmax.f32 %v214, -100.0
    %v217 = vmul.f32 %v125, %v207
    %v218 = vmul.f32 %v126, %v208
    %v219 = vmul.f32 %v127, %v215
    %v220 = vmul.f32 %v128, %v216
    %v221 = vadd.f32 %v217, %v219
    %v222 = vadd.f32 %v218, %v220
    %v223 = vadd.f32 %v199, %v221
    %v224 = vadd.f32 %v200, %v222
    %v225 = vld [vmem:[#allocation10] sm:$0xff]
    %v226 = vld [vmem:[#allocation10 + $0x8] sm:$0xff]
    %v227 = vlog2.pop %v225
    %v228 = vmul.f32 %v227, 0.6931472
    %v229 = vlog2.pop %v226
    %v230 = vmul.f32 %v229, 0.6931472
    %v231 = vmax.f32 %v228, -100.0
    %v232 = vmax.f32 %v230, -100.0
    %v233 = vsub.f32 1.0, %v225
    %v234 = vsub.f32 1.0, %v226
    %v235 = vlog2.pop %v233
    %v236 = vmul.f32 %v235, 0.6931472
    %v237 = vlog2.pop %v234
    %v238 = vmul.f32 %v237, 0.6931472
    %v239 = vmax.f32 %v236, -100.0
    %v240 = vmax.f32 %v238, -100.0
    %v241 = vmul.f32 %v125, %v231
    %v242 = vmul.f32 %v126, %v232
    %v243 = vmul.f32 %v127, %v239
    %v244 = vmul.f32 %v128, %v240
    %v245 = vadd.f32 %v241, %v243
    %v246 = vadd.f32 %v242, %v244
    %v247 = vadd.f32 %v223, %v245
    %v248 = vadd.f32 %v224, %v246
    %v249 = vld [vmem:[%s5] sm:$0xff]
    %v250 = vld [vmem:[%s5 + $0x8] sm:$0xff]
    %v251 = vlog2.pop %v249
    %v252 = vmul.f32 %v251, 0.6931472
    %v253 = vlog2.pop %v250
    %v254 = vmul.f32 %v253, 0.6931472
    %v255 = vmax.f32 %v252, -100.0
    %v256 = vmax.f32 %v254, -100.0
    %v257 = vsub.f32 1.0, %v249
    %v258 = vsub.f32 1.0, %v250
    %v259 = vlog2.pop %v257
    %v260 = vmul.f32 %v259, 0.6931472
    %v261 = vlog2.pop %v258
    %v262 = vmul.f32 %v261, 0.6931472
    %v263 = vmax.f32 %v260, -100.0
    %v264 = vmax.f32 %v262, -100.0
    %v265 = vmul.f32 %v125, %v255
    %v266 = vmul.f32 %v126, %v256
    %v267 = vmul.f32 %v127, %v263
    %v268 = vmul.f32 %v128, %v264
    %v269 = vadd.f32 %v265, %v267
    %v270 = vadd.f32 %v266, %v268
    %v271 = vadd.f32 %v247, %v269
    %v272 = vadd.f32 %v248, %v270
    %v273 = vld [vmem:[#allocation11] sm:$0xff]
    %v274 = vld [vmem:[#allocation11 + $0x8] sm:$0xff]
    %v275 = vlog2.pop %v273
    %v276 = vmul.f32 %v275, 0.6931472
    %v277 = vlog2.pop %v274
    %v278 = vmul.f32 %v277, 0.6931472
    %v279 = vmax.f32 %v276, -100.0
    %v280 = vmax.f32 %v278, -100.0
    %v281 = vsub.f32 1.0, %v273
    %v282 = vsub.f32 1.0, %v274
    %v283 = vlog2.pop %v281
    %v284 = vmul.f32 %v283, 0.6931472
    %v285 = vlog2.pop %v282
    %v286 = vmul.f32 %v285, 0.6931472
    %v287 = vmax.f32 %v284, -100.0
    %v288 = vmax.f32 %v286, -100.0
    %v289 = vmul.f32 %v125, %v279
    %v290 = vmul.f32 %v126, %v280
    %v291 = vmul.f32 %v127, %v287
    %v292 = vmul.f32 %v128, %v288
    %v293 = vadd.f32 %v289, %v291
    %v294 = vadd.f32 %v290, %v292
    %v295 = vadd.f32 %v271, %v293
    %v296 = vadd.f32 %v272, %v294
    %v297 = vadd.f32 %v295, %v296
    %v298 = vadd.f32 %v297, 0.0
    %v299 = vsub.f32 0.0, %v298
    %300 = vst [vmem:[#allocation14] sm:$0xff] %v299
    // Predicated region
    $region62: #{tpu_custom_call.1} parent=1 // pred_check
      _
    $region63: #{tpu_custom_call.1} parent=1 // pred_check_branch
      %302 = sbr.rel (0) target = $region65
    $region64: #{tpu_custom_call.1} parent=1 // pred_region
      %s304 = ssub.s32 128, 128
      %305 = vsyncadd [#allocation4], %s304
      %s307 = sshll.u32 [#allocation14], 4
      %s308 = int_to_ptr.vmem [resolvable:$true] %s307
      %310 = dma.vmem_to_hbm [thread:$0]  %s308, 128, %s8, [#allocation4]
    $region65: #{tpu_custom_call.1} parent=1 // pred_fallthru
      _
    // Predicated region
    $region66: #{tpu_custom_call.1} parent=1 // pred_check
      _
    $region67: #{tpu_custom_call.1} parent=1 // pred_check_branch
      %312 = sbr.rel (0) target = $region69
    $region68: #{tpu_custom_call.1} parent=1 // pred_region
      %313 = dma.done [#allocation4], 128
    $region69: #{tpu_custom_call.1} parent=1 // pred_fallthru
      _
    %314 = vsyncpa [#allocation3], 1
    %315 = vsyncpa [#allocation6], 1
    %316 = vsyncpa [#allocation9], 1
    %317 = vsyncpa [#allocation12], 1
    %318 = vsyncpa [#allocation4], 1

</llo_original>
